<compile_context>
chip_gen: v5e
topology: v5e:2x2
jax: 0.10.0
libtpu: 0.0.40
codegen_flags: <defaults>
</compile_context>

<pallas_src>
import functools

import jax
import jax.numpy as jnp
from jax.experimental import pallas as pl
from jax.experimental.pallas import tpu as pltpu


def _vmem_capacity_bytes():
    try:
        return int(pltpu.get_tpu_info().vmem_capacity_bytes)
    except Exception:
        return 64 * 1024 * 1024  # conservative default (v7x per-TensorCore VMEM)


# ----------------------------------------------------------------------------
# Pallas kernel: whole encoder as a chain of (Cout,Cin)x(Cin,T) matmuls with the
# activation tile resident in VMEM between layers.
#   x_ref : (1, Cin_total, T) bf16   (Cin_total = 9*in_channels after im2col)
#   per layer l: w_l (Cout_l, Cin_l) bf16, b_l (Cout_l, 1) f32
#   o_ref : (1, Cout_last, T)
# ----------------------------------------------------------------------------
def _fused_pointwise_stack_kernel(x_ref, *refs, acts):
    o_ref = refs[-1]
    wb = refs[:-1]                      # w0, b0, w1, b1, ...
    h = x_ref[0]                        # (Cin_total, T) bf16
    out = None
    for l, act in enumerate(acts):
        w = wb[2 * l][...]              # (Cout_l, Cin_l) bf16
        b = wb[2 * l + 1][...]          # (Cout_l, 1)     f32
        acc = jnp.dot(w, h, preferred_element_type=jnp.float32) + b
        if act == "relu":
            acc = jnp.maximum(acc, 0.0)
        elif act == "silu":
            # exp and the approximate reciprocal both run on the EUP slot,
            # keeping the VALU free of an f32 divide.
            acc = acc * pl.reciprocal(1.0 + jnp.exp(-acc), approx=True)
        out = acc
        # TODO(synk): intermediates are recast to bf16 for the next MXU matmul
        # (f32 accumulation per layer); validate against an f32 reference tolerance.
        h = acc.astype(jnp.bfloat16)
    o_ref[0] = out.astype(o_ref.dtype)


def _choose_spatial_tile(hw, per_col_bytes, budget_bytes, n_batch,
                         min_parallel_steps=2):
    """Largest 128-multiple lane tile within the VMEM budget; >=2 grid steps."""
    hw128 = -(-hw // 128) * 128
    cap = max(128, (budget_bytes // max(per_col_bytes, 1)) // 128 * 128)
    t = min(cap, hw128)
    while t > 128 and hw128 % t != 0:          # avoid gratuitous tail padding
        t -= 128
    # Expose >=2 parallel grid steps so both v7x TensorCores get work
    # (harmless on single-TC v5e/v6e).
    while n_batch * (hw128 // t) < min_parallel_steps and t > 128:
        t = max(128, t // 2)
        while t > 128 and hw128 % t != 0:
            t -= 128
    hw_pad = -(-hw128 // t) * t
    return t, hw_pad


def fused_encoder_call(x_cols, layers, out_dtype):
    """x_cols: (N, Cin_total, HW).  layers: list of (w (Cout,Cin), b (Cout,), act|None).

    One pallas_call for the whole layer chain; only x_cols and the final output
    touch HBM.
    """
    n, cin_total, hw = x_cols.shape
    cout_last = layers[-1][0].shape[0]
    c_max = max(w.shape[0] for w, _, _ in layers)
    out_bytes = jnp.dtype(out_dtype).itemsize

    vmem_cap = _vmem_capacity_bytes()
    # ~16 MiB pipeline working set on a 64 MiB part (v7x), ~24 MiB on 128 MiB parts.
    budget = min(24 << 20, vmem_cap // 4)
    # Per spatial column: 2x-buffered bf16 input block + 2x-buffered output block
    # + f32 accumulator and bf16 copy of the widest chain intermediate (x2 live).
    per_col = 2 * 2 * cin_total + 2 * out_bytes * cout_last + 2 * 6 * c_max
    t, hw_pad = _choose_spatial_tile(hw, per_col, budget, n)

    if hw_pad != hw:
        # Lane-dense (128-multiple) stores instead of a full-extent unaligned block.
        x_cols = jnp.pad(x_cols, ((0, 0), (0, 0), (0, hw_pad - hw)))

    acts = tuple(a for _, _, a in layers)
    kernel = functools.partial(_fused_pointwise_stack_kernel, acts=acts)

    in_specs = [pl.BlockSpec((1, cin_total, t), lambda i, j: (i, 0, j))]
    args = [x_cols.astype(jnp.bfloat16)]
    for w, b, _ in layers:
        co, ci = w.shape
        in_specs.append(pl.BlockSpec((co, ci), lambda i, j: (0, 0)))
        in_specs.append(pl.BlockSpec((co, 1), lambda i, j: (0, 0)))
        args.append(w.astype(jnp.bfloat16))
        args.append(b.reshape(co, 1).astype(jnp.float32))

    out = pl.pallas_call(
        kernel,
        out_shape=jax.ShapeDtypeStruct((n, cout_last, hw_pad), out_dtype),
        grid_spec=pltpu.PrefetchScalarGridSpec(
            num_scalar_prefetch=0,
            grid=(n, hw_pad // t),
            in_specs=in_specs,
            out_specs=pl.BlockSpec((1, cout_last, t), lambda i, j: (i, 0, j)),
        ),
        compiler_params=pltpu.CompilerParams(
            dimension_semantics=("parallel", "parallel"),
            vmem_limit_bytes=int(min(vmem_cap // 2, 64 << 20)),
        ),
    )(*args)
    return out[:, :, :hw] if hw_pad != hw else out


# ----------------------------------------------------------------------------
# Thin JAX glue: strided im2col of the 3x3 stem receptive fields, evaluated ONLY
# at the stride-2^S positions the downblocks keep (stride hoisting).
# ----------------------------------------------------------------------------
def _strided_im2col3x3(x_nchw, stride):
    """(N,C,H,W) -> (N, 9*C, Hs*Ws) with Hs=ceil(H/stride), Ws=ceil(W/stride)."""
    n, c, h, w = x_nchw.shape
    hs = -(-h // stride)
    ws = -(-w // stride)
    xp = jnp.pad(x_nchw, ((0, 0), (0, 0), (1, 1), (1, 1)))
    taps = []
    for dy in range(3):
        for dx in range(3):
            taps.append(xp[:, :,
                           dy:dy + (hs - 1) * stride + 1:stride,
                           dx:dx + (ws - 1) * stride + 1:stride])
    # TODO(synk): for configurations where stride hoisting is invalid (blocks with
    # spatial support) the 3x3 stem should instead DMA halo slabs in-kernel
    # (memory_space=pl.ANY + pltpu.make_async_copy) rather than materialize im2col.
    return jnp.concatenate(taps, axis=1).reshape(n, 9 * c, hs * ws), hs, ws


# ----------------------------------------------------------------------------
# Parameters (deterministic, mirroring Encoder.__init__ channel bookkeeping)
# ----------------------------------------------------------------------------
def init_encoder_params(key, in_channels, latent_dim, depths, dims):
    eps = 1e-5
    key, kw, kg, kb, km, kv = jax.random.split(key, 6)
    w_stem = jax.random.normal(kw, (dims[0], 9 * in_channels), jnp.float32) * 0.05
    gamma = 1.0 + 0.1 * jax.random.normal(kg, (dims[0],), jnp.float32)
    beta = 0.1 * jax.random.normal(kb, (dims[0],), jnp.float32)
    mean = 0.1 * jax.random.normal(km, (dims[0],), jnp.float32)
    var = 1.0 + 0.1 * jnp.abs(jax.random.normal(kv, (dims[0],), jnp.float32))
    scale = gamma / jnp.sqrt(var + eps)
    # TODO(synk): BatchNorm folded in eval mode; training-mode batch statistics
    # are not reproduced.
    stem = (w_stem * scale[:, None], beta - mean * scale)

    stages = []
    for s, repeats in enumerate(depths):
        cin = dims[s] if s == 0 else dims[s - 1]
        cout = dims[s]
        key, kw_, kb_ = jax.random.split(key, 3)
        layers = [(jax.random.normal(kw_, (cout, cin), jnp.float32) * 0.05,
                   0.01 * jax.random.normal(kb_, (cout,), jnp.float32), None)]
        for _ in range(repeats):
            key, kw_, kb_ = jax.random.split(key, 3)
            layers.append((jax.random.normal(kw_, (cout, cout), jnp.float32) * 0.05,
                           0.01 * jax.random.normal(kb_, (cout,), jnp.float32),
                           "relu"))
        stages.append(layers)

    key, kw_, kb_ = jax.random.split(key, 3)
    bottleneck = (jax.random.normal(kw_, (latent_dim, dims[-1]), jnp.float32) * 0.05,
                  0.01 * jax.random.normal(kb_, (latent_dim,), jnp.float32), None)
    return stem, stages, bottleneck


# ----------------------------------------------------------------------------
# Encoder forward: stem -> stages (downblock + blocks) -> bottleneck,
# fused into one Pallas kernel with all stride-2 subsamples hoisted to the front.
# Exact only because every block/downblock here is a 1x1 (pointwise) conv.
# ----------------------------------------------------------------------------
def encoder_forward(x_nchw, stem, stages, bottleneck):
    n = x_nchw.shape[0]
    x_nchw = x_nchw.astype(jnp.bfloat16)          # halve HBM traffic end-to-end

    stride = 2 ** len(stages)                     # combined downblock stride
    x_cols, hs, ws = _strided_im2col3x3(x_nchw, stride)

    w_stem, b_stem = stem
    layers = [(w_stem, b_stem, "silu")]           # stem (3x3 via im2col columns)
    for stage_layers in stages:                   # downblock + blocks per stage
        layers.extend(stage_layers)
    layers.append(bottleneck)                     # final 1x1 conv

    y = fused_encoder_call(x_cols, layers, jnp.float32)   # single pallas_call
    latent = bottleneck[0].shape[0]
    return y.reshape(n, latent, hs, ws)           # NCHW throughout, no transposes


# TODO(synk): `block`/`downblock` are abstract injected modules in the original
# code; concrete pointwise-conv instantiations are used here, so general 3x3 /
# bottleneck-residual block variants (which would invalidate the stride hoist)
# are not reproduced.

if __name__ == "__main__":
    in_channels = 4
    latent_dim = 8
    depths = [2, 2]
    dims = [16, 32]

    key = jax.random.PRNGKey(0)
    key, kx = jax.random.split(key)
    x = jax.random.normal(kx, (2, in_channels, 16, 16), jnp.float32)   # NCHW

    stem, stages, bottleneck = init_encoder_params(
        key, in_channels, latent_dim, depths, dims)

    fwd = jax.jit(lambda inp: encoder_forward(inp, stem, stages, bottleneck))
    y = fwd(x)
    jax.block_until_ready(y)
    assert y.shape == (2, latent_dim, 4, 4), y.shape
    assert bool(jnp.all(jnp.isfinite(y)))
    print("KERNEL_OK")
</pallas_src>

<mosaic_0001>
module attributes {stable_mosaic.version = 11 : i64} {
  func.func @_fused_pointwise_stack_kernel(%arg0: i32, %arg1: i32, %arg2: memref<1x36x128xbf16, #tpu.memory_space<vmem>>, %arg3: memref<16x36xbf16, #tpu.memory_space<vmem>>, %arg4: memref<16x1xf32, #tpu.memory_space<vmem>>, %arg5: memref<16x16xbf16, #tpu.memory_space<vmem>>, %arg6: memref<16x1xf32, #tpu.memory_space<vmem>>, %arg7: memref<16x16xbf16, #tpu.memory_space<vmem>>, %arg8: memref<16x1xf32, #tpu.memory_space<vmem>>, %arg9: memref<16x16xbf16, #tpu.memory_space<vmem>>, %arg10: memref<16x1xf32, #tpu.memory_space<vmem>>, %arg11: memref<32x16xbf16, #tpu.memory_space<vmem>>, %arg12: memref<32x1xf32, #tpu.memory_space<vmem>>, %arg13: memref<32x32xbf16, #tpu.memory_space<vmem>>, %arg14: memref<32x1xf32, #tpu.memory_space<vmem>>, %arg15: memref<32x32xbf16, #tpu.memory_space<vmem>>, %arg16: memref<32x1xf32, #tpu.memory_space<vmem>>, %arg17: memref<8x32xbf16, #tpu.memory_space<vmem>>, %arg18: memref<8x1xf32, #tpu.memory_space<vmem>>, %arg19: memref<1x8x128xf32, #tpu.memory_space<vmem>>) attributes {dimension_semantics = [#tpu.dimension_semantics<parallel>, #tpu.dimension_semantics<parallel>], iteration_bounds = array<i64: 2, 1>, scalar_prefetch = 0 : i64, scratch_operands = 0 : i64, tpu.core_type = #tpu.core_type<tc>, window_params = [{transform_indices = @transform_0, window_bounds = array<i64: 1, 36, 128>}, {pipeline_mode = #tpu.pipeline_mode<synchronous>, transform_indices = @transform_1, window_bounds = array<i64: 16, 36>}, {pipeline_mode = #tpu.pipeline_mode<synchronous>, transform_indices = @transform_2, window_bounds = array<i64: 16, 1>}, {pipeline_mode = #tpu.pipeline_mode<synchronous>, transform_indices = @transform_3, window_bounds = array<i64: 16, 16>}, {pipeline_mode = #tpu.pipeline_mode<synchronous>, transform_indices = @transform_4, window_bounds = array<i64: 16, 1>}, {pipeline_mode = #tpu.pipeline_mode<synchronous>, transform_indices = @transform_5, window_bounds = array<i64: 16, 16>}, {pipeline_mode = #tpu.pipeline_mode<synchronous>, transform_indices = @transform_6, window_bounds = array<i64: 16, 1>}, {pipeline_mode = #tpu.pipeline_mode<synchronous>, transform_indices = @transform_7, window_bounds = array<i64: 16, 16>}, {pipeline_mode = #tpu.pipeline_mode<synchronous>, transform_indices = @transform_8, window_bounds = array<i64: 16, 1>}, {pipeline_mode = #tpu.pipeline_mode<synchronous>, transform_indices = @transform_9, window_bounds = array<i64: 32, 16>}, {pipeline_mode = #tpu.pipeline_mode<synchronous>, transform_indices = @transform_10, window_bounds = array<i64: 32, 1>}, {pipeline_mode = #tpu.pipeline_mode<synchronous>, transform_indices = @transform_11, window_bounds = array<i64: 32, 32>}, {pipeline_mode = #tpu.pipeline_mode<synchronous>, transform_indices = @transform_12, window_bounds = array<i64: 32, 1>}, {pipeline_mode = #tpu.pipeline_mode<synchronous>, transform_indices = @transform_13, window_bounds = array<i64: 32, 32>}, {pipeline_mode = #tpu.pipeline_mode<synchronous>, transform_indices = @transform_14, window_bounds = array<i64: 32, 1>}, {pipeline_mode = #tpu.pipeline_mode<synchronous>, transform_indices = @transform_15, window_bounds = array<i64: 8, 32>}, {pipeline_mode = #tpu.pipeline_mode<synchronous>, transform_indices = @transform_16, window_bounds = array<i64: 8, 1>}, {transform_indices = @transform_17, window_bounds = array<i64: 1, 8, 128>}]} {
    %c0 = arith.constant 0 : index
    %c0_0 = arith.constant 0 : index
    %c0_1 = arith.constant 0 : index
    %0 = vector.load %arg2[%c0, %c0_0, %c0_1] : memref<1x36x128xbf16, #tpu.memory_space<vmem>>, vector<1x36x128xbf16>
    %1 = vector.shape_cast %0 : vector<1x36x128xbf16> to vector<36x128xbf16>
    %c0_2 = arith.constant 0 : index
    %c0_3 = arith.constant 0 : index
    %2 = vector.load %arg3[%c0_2, %c0_3] : memref<16x36xbf16, #tpu.memory_space<vmem>>, vector<16x36xbf16>
    %c0_4 = arith.constant 0 : index
    %c0_5 = arith.constant 0 : index
    %3 = vector.load %arg4[%c0_4, %c0_5] : memref<16x1xf32, #tpu.memory_space<vmem>>, vector<16x1xf32>
    %cst = arith.constant dense<0.000000e+00> : vector<16x128xf32>
    %4 = tpu.matmul %2, %1, %cst {dimension_numbers = #tpu.dot_dimension_numbers<[1], [0], [0], [1], [0, 0, 1, 1], [], []>} : vector<16x36xbf16>, vector<36x128xbf16>, vector<16x128xf32> -> vector<16x128xf32>
    %5 = vector.broadcast %3 : vector<16x1xf32> to vector<16x128xf32>
    %6 = arith.addf %4, %5 : vector<16x128xf32>
    %cst_6 = arith.constant 0.000000e+00 : f32
    %7 = vector.broadcast %cst_6 : f32 to vector<16x128xf32>
    %8 = arith.subf %7, %6 : vector<16x128xf32>
    %9 = math.exp %8 : vector<16x128xf32>
    %cst_7 = arith.constant 1.000000e+00 : f32
    %10 = vector.broadcast %cst_7 : f32 to vector<16x128xf32>
    %11 = arith.addf %10, %9 : vector<16x128xf32>
    %12 = tpu.reciprocal %11 {approx = true} : vector<16x128xf32> -> vector<16x128xf32>
    %13 = arith.mulf %6, %12 : vector<16x128xf32>
    %14 = arith.truncf %13 : vector<16x128xf32> to vector<16x128xbf16>
    %c0_8 = arith.constant 0 : index
    %c0_9 = arith.constant 0 : index
    %15 = vector.load %arg5[%c0_8, %c0_9] : memref<16x16xbf16, #tpu.memory_space<vmem>>, vector<16x16xbf16>
    %c0_10 = arith.constant 0 : index
    %c0_11 = arith.constant 0 : index
    %16 = vector.load %arg6[%c0_10, %c0_11] : memref<16x1xf32, #tpu.memory_space<vmem>>, vector<16x1xf32>
    %cst_12 = arith.constant dense<0.000000e+00> : vector<16x128xf32>
    %17 = tpu.matmul %15, %14, %cst_12 {dimension_numbers = #tpu.dot_dimension_numbers<[1], [0], [0], [1], [0, 0, 1, 1], [], []>} : vector<16x16xbf16>, vector<16x128xbf16>, vector<16x128xf32> -> vector<16x128xf32>
    %18 = vector.broadcast %16 : vector<16x1xf32> to vector<16x128xf32>
    %19 = arith.addf %17, %18 : vector<16x128xf32>
    %20 = arith.truncf %19 : vector<16x128xf32> to vector<16x128xbf16>
    %c0_13 = arith.constant 0 : index
    %c0_14 = arith.constant 0 : index
    %21 = vector.load %arg7[%c0_13, %c0_14] : memref<16x16xbf16, #tpu.memory_space<vmem>>, vector<16x16xbf16>
    %c0_15 = arith.constant 0 : index
    %c0_16 = arith.constant 0 : index
    %22 = vector.load %arg8[%c0_15, %c0_16] : memref<16x1xf32, #tpu.memory_space<vmem>>, vector<16x1xf32>
    %cst_17 = arith.constant dense<0.000000e+00> : vector<16x128xf32>
    %23 = tpu.matmul %21, %20, %cst_17 {dimension_numbers = #tpu.dot_dimension_numbers<[1], [0], [0], [1], [0, 0, 1, 1], [], []>} : vector<16x16xbf16>, vector<16x128xbf16>, vector<16x128xf32> -> vector<16x128xf32>
    %24 = vector.broadcast %22 : vector<16x1xf32> to vector<16x128xf32>
    %25 = arith.addf %23, %24 : vector<16x128xf32>
    %cst_18 = arith.constant 0.000000e+00 : f32
    %26 = vector.broadcast %cst_18 : f32 to vector<16x128xf32>
    %27 = arith.maximumf %25, %26 : vector<16x128xf32>
    %28 = arith.truncf %27 : vector<16x128xf32> to vector<16x128xbf16>
    %c0_19 = arith.constant 0 : index
    %c0_20 = arith.constant 0 : index
    %29 = vector.load %arg9[%c0_19, %c0_20] : memref<16x16xbf16, #tpu.memory_space<vmem>>, vector<16x16xbf16>
    %c0_21 = arith.constant 0 : index
    %c0_22 = arith.constant 0 : index
    %30 = vector.load %arg10[%c0_21, %c0_22] : memref<16x1xf32, #tpu.memory_space<vmem>>, vector<16x1xf32>
    %cst_23 = arith.constant dense<0.000000e+00> : vector<16x128xf32>
    %31 = tpu.matmul %29, %28, %cst_23 {dimension_numbers = #tpu.dot_dimension_numbers<[1], [0], [0], [1], [0, 0, 1, 1], [], []>} : vector<16x16xbf16>, vector<16x128xbf16>, vector<16x128xf32> -> vector<16x128xf32>
    %32 = vector.broadcast %30 : vector<16x1xf32> to vector<16x128xf32>
    %33 = arith.addf %31, %32 : vector<16x128xf32>
    %cst_24 = arith.constant 0.000000e+00 : f32
    %34 = vector.broadcast %cst_24 : f32 to vector<16x128xf32>
    %35 = arith.maximumf %33, %34 : vector<16x128xf32>
    %36 = arith.truncf %35 : vector<16x128xf32> to vector<16x128xbf16>
    %c0_25 = arith.constant 0 : index
    %c0_26 = arith.constant 0 : index
    %37 = vector.load %arg11[%c0_25, %c0_26] : memref<32x16xbf16, #tpu.memory_space<vmem>>, vector<32x16xbf16>
    %c0_27 = arith.constant 0 : index
    %c0_28 = arith.constant 0 : index
    %38 = vector.load %arg12[%c0_27, %c0_28] : memref<32x1xf32, #tpu.memory_space<vmem>>, vector<32x1xf32>
    %cst_29 = arith.constant dense<0.000000e+00> : vector<32x128xf32>
    %39 = tpu.matmul %37, %36, %cst_29 {dimension_numbers = #tpu.dot_dimension_numbers<[1], [0], [0], [1], [0, 0, 1, 1], [], []>} : vector<32x16xbf16>, vector<16x128xbf16>, vector<32x128xf32> -> vector<32x128xf32>
    %40 = vector.broadcast %38 : vector<32x1xf32> to vector<32x128xf32>
    %41 = arith.addf %39, %40 : vector<32x128xf32>
    %42 = arith.truncf %41 : vector<32x128xf32> to vector<32x128xbf16>
    %c0_30 = arith.constant 0 : index
    %c0_31 = arith.constant 0 : index
    %43 = vector.load %arg13[%c0_30, %c0_31] : memref<32x32xbf16, #tpu.memory_space<vmem>>, vector<32x32xbf16>
    %c0_32 = arith.constant 0 : index
    %c0_33 = arith.constant 0 : index
    %44 = vector.load %arg14[%c0_32, %c0_33] : memref<32x1xf32, #tpu.memory_space<vmem>>, vector<32x1xf32>
    %cst_34 = arith.constant dense<0.000000e+00> : vector<32x128xf32>
    %45 = tpu.matmul %43, %42, %cst_34 {dimension_numbers = #tpu.dot_dimension_numbers<[1], [0], [0], [1], [0, 0, 1, 1], [], []>} : vector<32x32xbf16>, vector<32x128xbf16>, vector<32x128xf32> -> vector<32x128xf32>
    %46 = vector.broadcast %44 : vector<32x1xf32> to vector<32x128xf32>
    %47 = arith.addf %45, %46 : vector<32x128xf32>
    %cst_35 = arith.constant 0.000000e+00 : f32
    %48 = vector.broadcast %cst_35 : f32 to vector<32x128xf32>
    %49 = arith.maximumf %47, %48 : vector<32x128xf32>
    %50 = arith.truncf %49 : vector<32x128xf32> to vector<32x128xbf16>
    %c0_36 = arith.constant 0 : index
    %c0_37 = arith.constant 0 : index
    %51 = vector.load %arg15[%c0_36, %c0_37] : memref<32x32xbf16, #tpu.memory_space<vmem>>, vector<32x32xbf16>
    %c0_38 = arith.constant 0 : index
    %c0_39 = arith.constant 0 : index
    %52 = vector.load %arg16[%c0_38, %c0_39] : memref<32x1xf32, #tpu.memory_space<vmem>>, vector<32x1xf32>
    %cst_40 = arith.constant dense<0.000000e+00> : vector<32x128xf32>
    %53 = tpu.matmul %51, %50, %cst_40 {dimension_numbers = #tpu.dot_dimension_numbers<[1], [0], [0], [1], [0, 0, 1, 1], [], []>} : vector<32x32xbf16>, vector<32x128xbf16>, vector<32x128xf32> -> vector<32x128xf32>
    %54 = vector.broadcast %52 : vector<32x1xf32> to vector<32x128xf32>
    %55 = arith.addf %53, %54 : vector<32x128xf32>
    %cst_41 = arith.constant 0.000000e+00 : f32
    %56 = vector.broadcast %cst_41 : f32 to vector<32x128xf32>
    %57 = arith.maximumf %55, %56 : vector<32x128xf32>
    %58 = arith.truncf %57 : vector<32x128xf32> to vector<32x128xbf16>
    %c0_42 = arith.constant 0 : index
    %c0_43 = arith.constant 0 : index
    %59 = vector.load %arg17[%c0_42, %c0_43] : memref<8x32xbf16, #tpu.memory_space<vmem>>, vector<8x32xbf16>
    %c0_44 = arith.constant 0 : index
    %c0_45 = arith.constant 0 : index
    %60 = vector.load %arg18[%c0_44, %c0_45] : memref<8x1xf32, #tpu.memory_space<vmem>>, vector<8x1xf32>
    %cst_46 = arith.constant dense<0.000000e+00> : vector<8x128xf32>
    %61 = tpu.matmul %59, %58, %cst_46 {dimension_numbers = #tpu.dot_dimension_numbers<[1], [0], [0], [1], [0, 0, 1, 1], [], []>} : vector<8x32xbf16>, vector<32x128xbf16>, vector<8x128xf32> -> vector<8x128xf32>
    %62 = vector.broadcast %60 : vector<8x1xf32> to vector<8x128xf32>
    %63 = arith.addf %61, %62 : vector<8x128xf32>
    %c0_47 = arith.constant 0 : index
    %c0_48 = arith.constant 0 : index
    %c0_49 = arith.constant 0 : index
    %64 = vector.load %arg19[%c0_47, %c0_48, %c0_49] : memref<1x8x128xf32, #tpu.memory_space<vmem>>, vector<1x8x128xf32>
    %65 = vector.shape_cast %64 : vector<1x8x128xf32> to vector<8x128xf32>
    %66 = vector.shape_cast %63 : vector<8x128xf32> to vector<1x8x128xf32>
    tpu.vector_store %arg19[%c0_47, %c0_48, %c0_49], %66 {strides = array<i32>} : memref<1x8x128xf32, #tpu.memory_space<vmem>>, vector<1x8x128xf32>,
    return
  }
  func.func @transform_0(%arg0: i32, %arg1: i32) -> (i32, i32, i32) {
    %c0_i32 = arith.constant 0 : i32
    %c0_i32_0 = arith.constant 0 : i32
    return %arg0, %c0_i32, %arg1 : i32, i32, i32
  }
  func.func @transform_1(%arg0: i32, %arg1: i32) -> (i32, i32) {
    %c0_i32 = arith.constant 0 : i32
    %c0_i32_0 = arith.constant 0 : i32
    %c0_i32_1 = arith.constant 0 : i32
    return %c0_i32, %c0_i32_0 : i32, i32
  }
  func.func @transform_2(%arg0: i32, %arg1: i32) -> (i32, i32) {
    %c0_i32 = arith.constant 0 : i32
    %c0_i32_0 = arith.constant 0 : i32
    %c0_i32_1 = arith.constant 0 : i32
    return %c0_i32, %c0_i32_0 : i32, i32
  }
  func.func @transform_3(%arg0: i32, %arg1: i32) -> (i32, i32) {
    %c0_i32 = arith.constant 0 : i32
    %c0_i32_0 = arith.constant 0 : i32
    %c0_i32_1 = arith.constant 0 : i32
    return %c0_i32, %c0_i32_0 : i32, i32
  }
  func.func @transform_4(%arg0: i32, %arg1: i32) -> (i32, i32) {
    %c0_i32 = arith.constant 0 : i32
    %c0_i32_0 = arith.constant 0 : i32
    %c0_i32_1 = arith.constant 0 : i32
    return %c0_i32, %c0_i32_0 : i32, i32
  }
  func.func @transform_5(%arg0: i32, %arg1: i32) -> (i32, i32) {
    %c0_i32 = arith.constant 0 : i32
    %c0_i32_0 = arith.constant 0 : i32
    %c0_i32_1 = arith.constant 0 : i32
    return %c0_i32, %c0_i32_0 : i32, i32
  }
  func.func @transform_6(%arg0: i32, %arg1: i32) -> (i32, i32) {
    %c0_i32 = arith.constant 0 : i32
    %c0_i32_0 = arith.constant 0 : i32
    %c0_i32_1 = arith.constant 0 : i32
    return %c0_i32, %c0_i32_0 : i32, i32
  }
  func.func @transform_7(%arg0: i32, %arg1: i32) -> (i32, i32) {
    %c0_i32 = arith.constant 0 : i32
    %c0_i32_0 = arith.constant 0 : i32
    %c0_i32_1 = arith.constant 0 : i32
    return %c0_i32, %c0_i32_0 : i32, i32
  }
  func.func @transform_8(%arg0: i32, %arg1: i32) -> (i32, i32) {
    %c0_i32 = arith.constant 0 : i32
    %c0_i32_0 = arith.constant 0 : i32
    %c0_i32_1 = arith.constant 0 : i32
    return %c0_i32, %c0_i32_0 : i32, i32
  }
  func.func @transform_9(%arg0: i32, %arg1: i32) -> (i32, i32) {
    %c0_i32 = arith.constant 0 : i32
    %c0_i32_0 = arith.constant 0 : i32
    %c0_i32_1 = arith.constant 0 : i32
    return %c0_i32, %c0_i32_0 : i32, i32
  }
  func.func @transform_10(%arg0: i32, %arg1: i32) -> (i32, i32) {
    %c0_i32 = arith.constant 0 : i32
    %c0_i32_0 = arith.constant 0 : i32
    %c0_i32_1 = arith.constant 0 : i32
    return %c0_i32, %c0_i32_0 : i32, i32
  }
  func.func @transform_11(%arg0: i32, %arg1: i32) -> (i32, i32) {
    %c0_i32 = arith.constant 0 : i32
    %c0_i32_0 = arith.constant 0 : i32
    %c0_i32_1 = arith.constant 0 : i32
    return %c0_i32, %c0_i32_0 : i32, i32
  }
  func.func @transform_12(%arg0: i32, %arg1: i32) -> (i32, i32) {
    %c0_i32 = arith.constant 0 : i32
    %c0_i32_0 = arith.constant 0 : i32
    %c0_i32_1 = arith.constant 0 : i32
    return %c0_i32, %c0_i32_0 : i32, i32
  }
  func.func @transform_13(%arg0: i32, %arg1: i32) -> (i32, i32) {
    %c0_i32 = arith.constant 0 : i32
    %c0_i32_0 = arith.constant 0 : i32
    %c0_i32_1 = arith.constant 0 : i32
    return %c0_i32, %c0_i32_0 : i32, i32
  }
  func.func @transform_14(%arg0: i32, %arg1: i32) -> (i32, i32) {
    %c0_i32 = arith.constant 0 : i32
    %c0_i32_0 = arith.constant 0 : i32
    %c0_i32_1 = arith.constant 0 : i32
    return %c0_i32, %c0_i32_0 : i32, i32
  }
  func.func @transform_15(%arg0: i32, %arg1: i32) -> (i32, i32) {
    %c0_i32 = arith.constant 0 : i32
    %c0_i32_0 = arith.constant 0 : i32
    %c0_i32_1 = arith.constant 0 : i32
    return %c0_i32, %c0_i32_0 : i32, i32
  }
  func.func @transform_16(%arg0: i32, %arg1: i32) -> (i32, i32) {
    %c0_i32 = arith.constant 0 : i32
    %c0_i32_0 = arith.constant 0 : i32
    %c0_i32_1 = arith.constant 0 : i32
    return %c0_i32, %c0_i32_0 : i32, i32
  }
  func.func @transform_17(%arg0: i32, %arg1: i32) -> (i32, i32, i32) {
    %c0_i32 = arith.constant 0 : i32
    %c0_i32_0 = arith.constant 0 : i32
    return %arg0, %c0_i32, %arg1 : i32, i32, i32
  }
}

</mosaic_0001>

<llo_original>
// kernel: _lambda_.1
$region0: #{_lambda_.1}
  #allocation0 [shape = 'u32[]', space=smem, size = 0x4, offset = 0x4, fixed_abs, tag = 'smem constant byte address 0x4 - core index']
  #allocation1 [shape = 'u32[72,128]{1,0:T(1,128)}', space=vmem, size = 0x9000, scoped, tag = 'internal scratch']
  %s0 = inlined_call_operand.vmem [shape: bf16[2,36,128], index: 0, kind: input, shape index: {}]
  %s1 = inlined_call_operand.vmem [shape: bf16[16,36], index: 1, kind: input, shape index: {}]
  %s2 = inlined_call_operand.vmem [shape: f32[16,1], index: 2, kind: input, shape index: {}]
  %s3 = inlined_call_operand.vmem [shape: bf16[16,16], index: 3, kind: input, shape index: {}]
  %s4 = inlined_call_operand.vmem [shape: f32[16,1], index: 4, kind: input, shape index: {}]
  %s5 = inlined_call_operand.vmem [shape: bf16[16,16], index: 5, kind: input, shape index: {}]
  %s6 = inlined_call_operand.vmem [shape: f32[16,1], index: 6, kind: input, shape index: {}]
  %s7 = inlined_call_operand.vmem [shape: bf16[16,16], index: 7, kind: input, shape index: {}]
  %s8 = inlined_call_operand.vmem [shape: f32[16,1], index: 8, kind: input, shape index: {}]
  %s9 = inlined_call_operand.vmem [shape: bf16[32,16], index: 9, kind: input, shape index: {}]
  %s10 = inlined_call_operand.vmem [shape: f32[32,1], index: 10, kind: input, shape index: {}]
  %s11 = inlined_call_operand.vmem [shape: bf16[32,32], index: 11, kind: input, shape index: {}]
  %s12 = inlined_call_operand.vmem [shape: f32[32,1], index: 12, kind: input, shape index: {}]
  %s13 = inlined_call_operand.vmem [shape: bf16[32,32], index: 13, kind: input, shape index: {}]
  %s14 = inlined_call_operand.vmem [shape: f32[32,1], index: 14, kind: input, shape index: {}]
  %s15 = inlined_call_operand.vmem [shape: bf16[8,32], index: 15, kind: input, shape index: {}]
  %s16 = inlined_call_operand.vmem [shape: f32[8,1], index: 16, kind: input, shape index: {}]
  %s17 = inlined_call_operand.vmem [shape: f32[2,8,128], index: 17, kind: output, shape index: {}]
  %s18 = sld [smem:[#allocation0]]
  $region101: #{_lambda_.1} parent=0
    _
  %s20 = ssub.s32 1, %s18
  %s21 = scalar_select 0, %s20, %s18
  loop: start=0, step=1, limit=4
  $region2: #{_lambda_.1} parent=0 // loop_pre_header
    _
  $region3: #{_lambda_.1} parent=0 // loop_header
    %s23 = sphi 0, %s27
    %p24 = scmp.ge.s32.totalorder %s23, 4
    %s30 = sphi 0, %s42
    %s31 = sphi 0, %s38
    %s32 = sphi 0, %s30
    %s33 = sphi 0, %s31
    %s34 = sphi 0, %s32
    %s35 = sphi 0, %s33
    %s47 = sphi 0, %s49
    %s50 = sphi 0, %s47
    %s51 = sphi 0, %s50
    %s67 = sphi 0, %s51
    %s71 = sphi 0, %s71
    %s73 = sphi 0, %s71
    %s74 = sphi 0, %s73
    %s88 = sphi 0, %s74
    %s92 = sphi 0, %s92
    %s94 = sphi 0, %s92
    %s95 = sphi 0, %s94
    %s109 = sphi 0, %s95
    %s113 = sphi 0, %s113
    %s115 = sphi 0, %s113
    %s116 = sphi 0, %s115
    %s130 = sphi 0, %s116
    %s134 = sphi 0, %s134
    %s136 = sphi 0, %s134
    %s137 = sphi 0, %s136
    %s151 = sphi 0, %s137
    %s155 = sphi 0, %s155
    %s157 = sphi 0, %s155
    %s158 = sphi 0, %s157
    %s172 = sphi 0, %s158
    %s176 = sphi 0, %s176
    %s178 = sphi 0, %s176
    %s179 = sphi 0, %s178
    %s193 = sphi 0, %s179
    %s197 = sphi 0, %s197
    %s199 = sphi 0, %s197
    %s200 = sphi 0, %s199
    %s214 = sphi 0, %s200
    %s218 = sphi 0, %s218
    %s220 = sphi 0, %s218
    %s221 = sphi 0, %s220
    %s235 = sphi 0, %s221
    %s239 = sphi 0, %s239
    %s241 = sphi 0, %s239
    %s242 = sphi 0, %s241
    %s256 = sphi 0, %s242
    %s260 = sphi 0, %s260
    %s262 = sphi 0, %s260
    %s263 = sphi 0, %s262
    %s277 = sphi 0, %s263
    %s281 = sphi 0, %s281
    %s283 = sphi 0, %s281
    %s284 = sphi 0, %s283
    %s298 = sphi 0, %s284
    %s302 = sphi 0, %s302
    %s304 = sphi 0, %s302
    %s305 = sphi 0, %s304
    %s319 = sphi 0, %s305
    %s323 = sphi 0, %s323
    %s325 = sphi 0, %s323
    %s326 = sphi 0, %s325
    %s340 = sphi 0, %s326
    %s344 = sphi 0, %s344
    %s346 = sphi 0, %s344
    %s347 = sphi 0, %s346
    %s361 = sphi 0, %s347
    %s365 = sphi 0, %s365
    %s367 = sphi 0, %s365
    %s368 = sphi 0, %s367
    %s382 = sphi 0, %s368
    %s386 = sphi 0, %s386
    %s388 = sphi 0, %s386
    %s389 = sphi 0, %s388
    %s403 = sphi 0, %s389
    %s411 = sphi 0, %s413
    %s414 = sphi 0, %s411
    %s415 = sphi 0, %s414
    %s431 = sphi 0, %s415
  $region4: #{_lambda_.1} parent=0 // loop_header_branch
    %26 = sbr.rel (%p24) target = $region8
  $region5: #{_lambda_.1} parent=0 // loop_body
    %s28 = ssub.s32 %s23, 1
    %s29 = ssub.s32 %s23, 2
    %s36 = sadd.s32 1, %s31
    %p37 = scmp.ge.s32.totalorder %s36, 1
    %s38 = scalar_select %p37, 0, %s36
    %s39 = sadd.s32 1, %s30
    %s40 = scalar_select %p37, %s39, %s30
    %p41 = scmp.ge.s32.totalorder %s40, 2
    %s42 = scalar_select %p41, 0, %s40
    %s43 = ssub.s32 %s30, %s42
    %s44 = ssub.s32 %s31, %s38
    %s45 = sor.u32 %s43, %s44
    %p46 = scmp.eq.s32.totalorder %s45, 0
    %s48 = sadd.s32 %s47, 1
    %s49 = scalar_select %p46, %s47, %s48
    %p52 = pneg %p46
    %p53 = scmp.eq.s32.totalorder %s23, 1
    %p54 = por %p52, %p53
    %p55 = scmp.ne.s32.totalorder %s47, %s50
    %p56 = scmp.eq.s32.totalorder %s23, 0
    %p57 = por %p55, %p56
    %p58 = scmp.ne.s32.totalorder %s47, %s50
    %p59 = scmp.eq.s32.totalorder %s28, 1
    %p60 = por %p58, %p59
    %p61 = scmp.ne.s32.totalorder %s50, %s51
    %p62 = scmp.eq.s32.totalorder %s28, 0
    %p63 = por %p61, %p62
    %p64 = scmp.ne.s32.totalorder %s50, %s51
    %p65 = scmp.eq.s32.totalorder %s29, 1
    %p66 = por %p64, %p65
    %p68 = scmp.ne.s32.totalorder %s51, %s67
    %p69 = scmp.eq.s32.totalorder %s29, 0
    %p70 = por %p68, %p69
    %s72 = sadd.s32 %s71, 1
    %p75 = scmp.eq.s32.totalorder %s23, 1
    %p76 = scmp.ne.s32.totalorder %s71, %s73
    %p77 = scmp.eq.s32.totalorder %s23, 0
    %p78 = por %p76, %p77
    %p79 = scmp.ne.s32.totalorder %s71, %s73
    %p80 = scmp.eq.s32.totalorder %s28, 1
    %p81 = por %p79, %p80
    %p82 = scmp.ne.s32.totalorder %s73, %s74
    %p83 = scmp.eq.s32.totalorder %s28, 0
    %p84 = por %p82, %p83
    %p85 = scmp.ne.s32.totalorder %s73, %s74
    %p86 = scmp.eq.s32.totalorder %s29, 1
    %p87 = por %p85, %p86
    %p89 = scmp.ne.s32.totalorder %s74, %s88
    %p90 = scmp.eq.s32.totalorder %s29, 0
    %p91 = por %p89, %p90
    %s93 = sadd.s32 %s92, 1
    %p96 = scmp.eq.s32.totalorder %s23, 1
    %p97 = scmp.ne.s32.totalorder %s92, %s94
    %p98 = scmp.eq.s32.totalorder %s23, 0
    %p99 = por %p97, %p98
    %p100 = scmp.ne.s32.totalorder %s92, %s94
    %p101 = scmp.eq.s32.totalorder %s28, 1
    %p102 = por %p100, %p101
    %p103 = scmp.ne.s32.totalorder %s94, %s95
    %p104 = scmp.eq.s32.totalorder %s28, 0
    %p105 = por %p103, %p104
    %p106 = scmp.ne.s32.totalorder %s94, %s95
    %p107 = scmp.eq.s32.totalorder %s29, 1
    %p108 = por %p106, %p107
    %p110 = scmp.ne.s32.totalorder %s95, %s109
    %p111 = scmp.eq.s32.totalorder %s29, 0
    %p112 = por %p110, %p111
    %s114 = sadd.s32 %s113, 1
    %p117 = scmp.eq.s32.totalorder %s23, 1
    %p118 = scmp.ne.s32.totalorder %s113, %s115
    %p119 = scmp.eq.s32.totalorder %s23, 0
    %p120 = por %p118, %p119
    %p121 = scmp.ne.s32.totalorder %s113, %s115
    %p122 = scmp.eq.s32.totalorder %s28, 1
    %p123 = por %p121, %p122
    %p124 = scmp.ne.s32.totalorder %s115, %s116
    %p125 = scmp.eq.s32.totalorder %s28, 0
    %p126 = por %p124, %p125
    %p127 = scmp.ne.s32.totalorder %s115, %s116
    %p128 = scmp.eq.s32.totalorder %s29, 1
    %p129 = por %p127, %p128
    %p131 = scmp.ne.s32.totalorder %s116, %s130
    %p132 = scmp.eq.s32.totalorder %s29, 0
    %p133 = por %p131, %p132
    %s135 = sadd.s32 %s134, 1
    %p138 = scmp.eq.s32.totalorder %s23, 1
    %p139 = scmp.ne.s32.totalorder %s134, %s136
    %p140 = scmp.eq.s32.totalorder %s23, 0
    %p141 = por %p139, %p140
    %p142 = scmp.ne.s32.totalorder %s134, %s136
    %p143 = scmp.eq.s32.totalorder %s28, 1
    %p144 = por %p142, %p143
    %p145 = scmp.ne.s32.totalorder %s136, %s137
    %p146 = scmp.eq.s32.totalorder %s28, 0
    %p147 = por %p145, %p146
    %p148 = scmp.ne.s32.totalorder %s136, %s137
    %p149 = scmp.eq.s32.totalorder %s29, 1
    %p150 = por %p148, %p149
    %p152 = scmp.ne.s32.totalorder %s137, %s151
    %p153 = scmp.eq.s32.totalorder %s29, 0
    %p154 = por %p152, %p153
    %s156 = sadd.s32 %s155, 1
    %p159 = scmp.eq.s32.totalorder %s23, 1
    %p160 = scmp.ne.s32.totalorder %s155, %s157
    %p161 = scmp.eq.s32.totalorder %s23, 0
    %p162 = por %p160, %p161
    %p163 = scmp.ne.s32.totalorder %s155, %s157
    %p164 = scmp.eq.s32.totalorder %s28, 1
    %p165 = por %p163, %p164
    %p166 = scmp.ne.s32.totalorder %s157, %s158
    %p167 = scmp.eq.s32.totalorder %s28, 0
    %p168 = por %p166, %p167
    %p169 = scmp.ne.s32.totalorder %s157, %s158
    %p170 = scmp.eq.s32.totalorder %s29, 1
    %p171 = por %p169, %p170
    %p173 = scmp.ne.s32.totalorder %s158, %s172
    %p174 = scmp.eq.s32.totalorder %s29, 0
    %p175 = por %p173, %p174
    %s177 = sadd.s32 %s176, 1
    %p180 = scmp.eq.s32.totalorder %s23, 1
    %p181 = scmp.ne.s32.totalorder %s176, %s178
    %p182 = scmp.eq.s32.totalorder %s23, 0
    %p183 = por %p181, %p182
    %p184 = scmp.ne.s32.totalorder %s176, %s178
    %p185 = scmp.eq.s32.totalorder %s28, 1
    %p186 = por %p184, %p185
    %p187 = scmp.ne.s32.totalorder %s178, %s179
    %p188 = scmp.eq.s32.totalorder %s28, 0
    %p189 = por %p187, %p188
    %p190 = scmp.ne.s32.totalorder %s178, %s179
    %p191 = scmp.eq.s32.totalorder %s29, 1
    %p192 = por %p190, %p191
    %p194 = scmp.ne.s32.totalorder %s179, %s193
    %p195 = scmp.eq.s32.totalorder %s29, 0
    %p196 = por %p194, %p195
    %s198 = sadd.s32 %s197, 1
    %p201 = scmp.eq.s32.totalorder %s23, 1
    %p202 = scmp.ne.s32.totalorder %s197, %s199
    %p203 = scmp.eq.s32.totalorder %s23, 0
    %p204 = por %p202, %p203
    %p205 = scmp.ne.s32.totalorder %s197, %s199
    %p206 = scmp.eq.s32.totalorder %s28, 1
    %p207 = por %p205, %p206
    %p208 = scmp.ne.s32.totalorder %s199, %s200
    %p209 = scmp.eq.s32.totalorder %s28, 0
    %p210 = por %p208, %p209
    %p211 = scmp.ne.s32.totalorder %s199, %s200
    %p212 = scmp.eq.s32.totalorder %s29, 1
    %p213 = por %p211, %p212
    %p215 = scmp.ne.s32.totalorder %s200, %s214
    %p216 = scmp.eq.s32.totalorder %s29, 0
    %p217 = por %p215, %p216
    %s219 = sadd.s32 %s218, 1
    %p222 = scmp.eq.s32.totalorder %s23, 1
    %p223 = scmp.ne.s32.totalorder %s218, %s220
    %p224 = scmp.eq.s32.totalorder %s23, 0
    %p225 = por %p223, %p224
    %p226 = scmp.ne.s32.totalorder %s218, %s220
    %p227 = scmp.eq.s32.totalorder %s28, 1
    %p228 = por %p226, %p227
    %p229 = scmp.ne.s32.totalorder %s220, %s221
    %p230 = scmp.eq.s32.totalorder %s28, 0
    %p231 = por %p229, %p230
    %p232 = scmp.ne.s32.totalorder %s220, %s221
    %p233 = scmp.eq.s32.totalorder %s29, 1
    %p234 = por %p232, %p233
    %p236 = scmp.ne.s32.totalorder %s221, %s235
    %p237 = scmp.eq.s32.totalorder %s29, 0
    %p238 = por %p236, %p237
    %s240 = sadd.s32 %s239, 1
    %p243 = scmp.eq.s32.totalorder %s23, 1
    %p244 = scmp.ne.s32.totalorder %s239, %s241
    %p245 = scmp.eq.s32.totalorder %s23, 0
    %p246 = por %p244, %p245
    %p247 = scmp.ne.s32.totalorder %s239, %s241
    %p248 = scmp.eq.s32.totalorder %s28, 1
    %p249 = por %p247, %p248
    %p250 = scmp.ne.s32.totalorder %s241, %s242
    %p251 = scmp.eq.s32.totalorder %s28, 0
    %p252 = por %p250, %p251
    %p253 = scmp.ne.s32.totalorder %s241, %s242
    %p254 = scmp.eq.s32.totalorder %s29, 1
    %p255 = por %p253, %p254
    %p257 = scmp.ne.s32.totalorder %s242, %s256
    %p258 = scmp.eq.s32.totalorder %s29, 0
    %p259 = por %p257, %p258
    %s261 = sadd.s32 %s260, 1
    %p264 = scmp.eq.s32.totalorder %s23, 1
    %p265 = scmp.ne.s32.totalorder %s260, %s262
    %p266 = scmp.eq.s32.totalorder %s23, 0
    %p267 = por %p265, %p266
    %p268 = scmp.ne.s32.totalorder %s260, %s262
    %p269 = scmp.eq.s32.totalorder %s28, 1
    %p270 = por %p268, %p269
    %p271 = scmp.ne.s32.totalorder %s262, %s263
    %p272 = scmp.eq.s32.totalorder %s28, 0
    %p273 = por %p271, %p272
    %p274 = scmp.ne.s32.totalorder %s262, %s263
    %p275 = scmp.eq.s32.totalorder %s29, 1
    %p276 = por %p274, %p275
    %p278 = scmp.ne.s32.totalorder %s263, %s277
    %p279 = scmp.eq.s32.totalorder %s29, 0
    %p280 = por %p278, %p279
    %s282 = sadd.s32 %s281, 1
    %p285 = scmp.eq.s32.totalorder %s23, 1
    %p286 = scmp.ne.s32.totalorder %s281, %s283
    %p287 = scmp.eq.s32.totalorder %s23, 0
    %p288 = por %p286, %p287
    %p289 = scmp.ne.s32.totalorder %s281, %s283
    %p290 = scmp.eq.s32.totalorder %s28, 1
    %p291 = por %p289, %p290
    %p292 = scmp.ne.s32.totalorder %s283, %s284
    %p293 = scmp.eq.s32.totalorder %s28, 0
    %p294 = por %p292, %p293
    %p295 = scmp.ne.s32.totalorder %s283, %s284
    %p296 = scmp.eq.s32.totalorder %s29, 1
    %p297 = por %p295, %p296
    %p299 = scmp.ne.s32.totalorder %s284, %s298
    %p300 = scmp.eq.s32.totalorder %s29, 0
    %p301 = por %p299, %p300
    %s303 = sadd.s32 %s302, 1
    %p306 = scmp.eq.s32.totalorder %s23, 1
    %p307 = scmp.ne.s32.totalorder %s302, %s304
    %p308 = scmp.eq.s32.totalorder %s23, 0
    %p309 = por %p307, %p308
    %p310 = scmp.ne.s32.totalorder %s302, %s304
    %p311 = scmp.eq.s32.totalorder %s28, 1
    %p312 = por %p310, %p311
    %p313 = scmp.ne.s32.totalorder %s304, %s305
    %p314 = scmp.eq.s32.totalorder %s28, 0
    %p315 = por %p313, %p314
    %p316 = scmp.ne.s32.totalorder %s304, %s305
    %p317 = scmp.eq.s32.totalorder %s29, 1
    %p318 = por %p316, %p317
    %p320 = scmp.ne.s32.totalorder %s305, %s319
    %p321 = scmp.eq.s32.totalorder %s29, 0
    %p322 = por %p320, %p321
    %s324 = sadd.s32 %s323, 1
    %p327 = scmp.eq.s32.totalorder %s23, 1
    %p328 = scmp.ne.s32.totalorder %s323, %s325
    %p329 = scmp.eq.s32.totalorder %s23, 0
    %p330 = por %p328, %p329
    %p331 = scmp.ne.s32.totalorder %s323, %s325
    %p332 = scmp.eq.s32.totalorder %s28, 1
    %p333 = por %p331, %p332
    %p334 = scmp.ne.s32.totalorder %s325, %s326
    %p335 = scmp.eq.s32.totalorder %s28, 0
    %p336 = por %p334, %p335
    %p337 = scmp.ne.s32.totalorder %s325, %s326
    %p338 = scmp.eq.s32.totalorder %s29, 1
    %p339 = por %p337, %p338
    %p341 = scmp.ne.s32.totalorder %s326, %s340
    %p342 = scmp.eq.s32.totalorder %s29, 0
    %p343 = por %p341, %p342
    %s345 = sadd.s32 %s344, 1
    %p348 = scmp.eq.s32.totalorder %s23, 1
    %p349 = scmp.ne.s32.totalorder %s344, %s346
    %p350 = scmp.eq.s32.totalorder %s23, 0
    %p351 = por %p349, %p350
    %p352 = scmp.ne.s32.totalorder %s344, %s346
    %p353 = scmp.eq.s32.totalorder %s28, 1
    %p354 = por %p352, %p353
    %p355 = scmp.ne.s32.totalorder %s346, %s347
    %p356 = scmp.eq.s32.totalorder %s28, 0
    %p357 = por %p355, %p356
    %p358 = scmp.ne.s32.totalorder %s346, %s347
    %p359 = scmp.eq.s32.totalorder %s29, 1
    %p360 = por %p358, %p359
    %p362 = scmp.ne.s32.totalorder %s347, %s361
    %p363 = scmp.eq.s32.totalorder %s29, 0
    %p364 = por %p362, %p363
    %s366 = sadd.s32 %s365, 1
    %p369 = scmp.eq.s32.totalorder %s23, 1
    %p370 = scmp.ne.s32.totalorder %s365, %s367
    %p371 = scmp.eq.s32.totalorder %s23, 0
    %p372 = por %p370, %p371
    %p373 = scmp.ne.s32.totalorder %s365, %s367
    %p374 = scmp.eq.s32.totalorder %s28, 1
    %p375 = por %p373, %p374
    %p376 = scmp.ne.s32.totalorder %s367, %s368
    %p377 = scmp.eq.s32.totalorder %s28, 0
    %p378 = por %p376, %p377
    %p379 = scmp.ne.s32.totalorder %s367, %s368
    %p380 = scmp.eq.s32.totalorder %s29, 1
    %p381 = por %p379, %p380
    %p383 = scmp.ne.s32.totalorder %s368, %s382
    %p384 = scmp.eq.s32.totalorder %s29, 0
    %p385 = por %p383, %p384
    %s387 = sadd.s32 %s386, 1
    %p390 = scmp.eq.s32.totalorder %s23, 1
    %p391 = scmp.ne.s32.totalorder %s386, %s388
    %p392 = scmp.eq.s32.totalorder %s23, 0
    %p393 = por %p391, %p392
    %p394 = scmp.ne.s32.totalorder %s386, %s388
    %p395 = scmp.eq.s32.totalorder %s28, 1
    %p396 = por %p394, %p395
    %p397 = scmp.ne.s32.totalorder %s388, %s389
    %p398 = scmp.eq.s32.totalorder %s28, 0
    %p399 = por %p397, %p398
    %p400 = scmp.ne.s32.totalorder %s388, %s389
    %p401 = scmp.eq.s32.totalorder %s29, 1
    %p402 = por %p400, %p401
    %p404 = scmp.ne.s32.totalorder %s389, %s403
    %p405 = scmp.eq.s32.totalorder %s29, 0
    %p406 = por %p404, %p405
    %s407 = ssub.s32 %s30, %s42
    %s408 = ssub.s32 %s31, %s38
    %s409 = sor.u32 %s407, %s408
    %p410 = scmp.eq.s32.totalorder %s409, 0
    %s412 = sadd.s32 %s411, 1
    %s413 = scalar_select %p410, %s411, %s412
    %p416 = pneg %p410
    %p417 = scmp.eq.s32.totalorder %s23, 1
    %p418 = por %p416, %p417
    %p419 = scmp.ne.s32.totalorder %s411, %s414
    %p420 = scmp.eq.s32.totalorder %s23, 0
    %p421 = por %p419, %p420
    %p422 = scmp.ne.s32.totalorder %s411, %s414
    %p423 = scmp.eq.s32.totalorder %s28, 1
    %p424 = por %p422, %p423
    %p425 = scmp.ne.s32.totalorder %s414, %s415
    %p426 = scmp.eq.s32.totalorder %s28, 0
    %p427 = por %p425, %p426
    %p428 = scmp.ne.s32.totalorder %s414, %s415
    %p429 = scmp.eq.s32.totalorder %s29, 1
    %p430 = por %p428, %p429
    %p432 = scmp.ne.s32.totalorder %s415, %s431
    %p433 = scmp.eq.s32.totalorder %s29, 0
    %p434 = por %p432, %p433
    %p435 = scmp.le.s32.totalorder 1, %s23
    %p436 = scmp.lt.s32.totalorder %s23, 3
    %p437 = pnand %p435, %p436
    %p438 = pneg %p437
    // Predicated region
    $region9: #{_lambda_.1} parent=5 // pred_check
      _
    $region10: #{_lambda_.1} parent=5 // pred_check_branch
      %440 = sbr.rel (%p437) target = $region12
    $region11: #{_lambda_.1} parent=5 // pred_region
      %s441 = ssub.s32 %s23, 1
      // Predicated region
      $region13: #{_lambda_.1} parent=11 // pred_check
        %p442 = pneg %p84
      $region14: #{_lambda_.1} parent=11 // pred_check_branch
        %444 = sbr.rel (%p442) target = $region16
      $region15: #{_lambda_.1} parent=11 // pred_region
        _
      $region16: #{_lambda_.1} parent=11 // pred_fallthru
        _
      // Predicated region
      $region17: #{_lambda_.1} parent=11 // pred_check
        %p445 = pneg %p105
      $region18: #{_lambda_.1} parent=11 // pred_check_branch
        %447 = sbr.rel (%p445) target = $region20
      $region19: #{_lambda_.1} parent=11 // pred_region
        _
      $region20: #{_lambda_.1} parent=11 // pred_fallthru
        _
      // Predicated region
      $region21: #{_lambda_.1} parent=11 // pred_check
        %p448 = pneg %p126
      $region22: #{_lambda_.1} parent=11 // pred_check_branch
        %450 = sbr.rel (%p448) target = $region24
      $region23: #{_lambda_.1} parent=11 // pred_region
        _
      $region24: #{_lambda_.1} parent=11 // pred_fallthru
        _
      // Predicated region
      $region25: #{_lambda_.1} parent=11 // pred_check
        %p451 = pneg %p147
      $region26: #{_lambda_.1} parent=11 // pred_check_branch
        %453 = sbr.rel (%p451) target = $region28
      $region27: #{_lambda_.1} parent=11 // pred_region
        _
      $region28: #{_lambda_.1} parent=11 // pred_fallthru
        _
      // Predicated region
      $region29: #{_lambda_.1} parent=11 // pred_check
        %p454 = pneg %p168
      $region30: #{_lambda_.1} parent=11 // pred_check_branch
        %456 = sbr.rel (%p454) target = $region32
      $region31: #{_lambda_.1} parent=11 // pred_region
        _
      $region32: #{_lambda_.1} parent=11 // pred_fallthru
        _
      // Predicated region
      $region33: #{_lambda_.1} parent=11 // pred_check
        %p457 = pneg %p189
      $region34: #{_lambda_.1} parent=11 // pred_check_branch
        %459 = sbr.rel (%p457) target = $region36
      $region35: #{_lambda_.1} parent=11 // pred_region
        _
      $region36: #{_lambda_.1} parent=11 // pred_fallthru
        _
      // Predicated region
      $region37: #{_lambda_.1} parent=11 // pred_check
        %p460 = pneg %p210
      $region38: #{_lambda_.1} parent=11 // pred_check_branch
        %462 = sbr.rel (%p460) target = $region40
      $region39: #{_lambda_.1} parent=11 // pred_region
        _
      $region40: #{_lambda_.1} parent=11 // pred_fallthru
        _
      // Predicated region
      $region41: #{_lambda_.1} parent=11 // pred_check
        %p463 = pneg %p231
      $region42: #{_lambda_.1} parent=11 // pred_check_branch
        %465 = sbr.rel (%p463) target = $region44
      $region43: #{_lambda_.1} parent=11 // pred_region
        _
      $region44: #{_lambda_.1} parent=11 // pred_fallthru
        _
      // Predicated region
      $region45: #{_lambda_.1} parent=11 // pred_check
        %p466 = pneg %p252
      $region46: #{_lambda_.1} parent=11 // pred_check_branch
        %468 = sbr.rel (%p466) target = $region48
      $region47: #{_lambda_.1} parent=11 // pred_region
        _
      $region48: #{_lambda_.1} parent=11 // pred_fallthru
        _
      // Predicated region
      $region49: #{_lambda_.1} parent=11 // pred_check
        %p469 = pneg %p273
      $region50: #{_lambda_.1} parent=11 // pred_check_branch
        %471 = sbr.rel (%p469) target = $region52
      $region51: #{_lambda_.1} parent=11 // pred_region
        _
      $region52: #{_lambda_.1} parent=11 // pred_fallthru
        _
      // Predicated region
      $region53: #{_lambda_.1} parent=11 // pred_check
        %p472 = pneg %p294
      $region54: #{_lambda_.1} parent=11 // pred_check_branch
        %474 = sbr.rel (%p472) target = $region56
      $region55: #{_lambda_.1} parent=11 // pred_region
        _
      $region56: #{_lambda_.1} parent=11 // pred_fallthru
        _
      // Predicated region
      $region57: #{_lambda_.1} parent=11 // pred_check
        %p475 = pneg %p315
      $region58: #{_lambda_.1} parent=11 // pred_check_branch
        %477 = sbr.rel (%p475) target = $region60
      $region59: #{_lambda_.1} parent=11 // pred_region
        _
      $region60: #{_lambda_.1} parent=11 // pred_fallthru
        _
      // Predicated region
      $region61: #{_lambda_.1} parent=11 // pred_check
        %p478 = pneg %p336
      $region62: #{_lambda_.1} parent=11 // pred_check_branch
        %480 = sbr.rel (%p478) target = $region64
      $region63: #{_lambda_.1} parent=11 // pred_region
        _
      $region64: #{_lambda_.1} parent=11 // pred_fallthru
        _
      // Predicated region
      $region65: #{_lambda_.1} parent=11 // pred_check
        %p481 = pneg %p357
      $region66: #{_lambda_.1} parent=11 // pred_check_branch
        %483 = sbr.rel (%p481) target = $region68
      $region67: #{_lambda_.1} parent=11 // pred_region
        _
      $region68: #{_lambda_.1} parent=11 // pred_fallthru
        _
      // Predicated region
      $region69: #{_lambda_.1} parent=11 // pred_check
        %p484 = pneg %p378
      $region70: #{_lambda_.1} parent=11 // pred_check_branch
        %486 = sbr.rel (%p484) target = $region72
      $region71: #{_lambda_.1} parent=11 // pred_region
        _
      $region72: #{_lambda_.1} parent=11 // pred_fallthru
        _
      // Predicated region
      $region73: #{_lambda_.1} parent=11 // pred_check
        %p487 = pneg %p399
      $region74: #{_lambda_.1} parent=11 // pred_check_branch
        %489 = sbr.rel (%p487) target = $region76
      $region75: #{_lambda_.1} parent=11 // pred_region
        _
      $region76: #{_lambda_.1} parent=11 // pred_fallthru
        _
    $region12: #{_lambda_.1} parent=5 // pred_fallthru
      _
    %p490 = scmp.lt.s32.totalorder %s23, 2
    // Predicated region
    $region77: #{_lambda_.1} parent=5 // pred_check
      %p491 = pneg %p490
    $region78: #{_lambda_.1} parent=5 // pred_check_branch
      %493 = sbr.rel (%p491) target = $region80
    $region79: #{_lambda_.1} parent=5 // pred_region
      // Predicated region
      $region81: #{_lambda_.1} parent=79 // pred_check
        %p494 = pneg %p57
      $region82: #{_lambda_.1} parent=79 // pred_check_branch
        %496 = sbr.rel (%p494) target = $region84
      $region83: #{_lambda_.1} parent=79 // pred_region
        %p497 = scmp.lt.s32.totalorder %s30, 1
        %s498 = scalar_select %p497, %s30, 1
        %p499 = scmp.lt.s32.totalorder %s31, 0
        %s500 = scalar_select %p499, %s31, 0
        %s501 = smul.addr %s498, 5
        %s502 = sadd.s32 %s500, %s501
        %s503 = smul.addr %s502, 4
        %s504 = scalar_lea.vmem %s0, %s503
      $region84: #{_lambda_.1} parent=79 // pred_fallthru
        _
    $region80: #{_lambda_.1} parent=5 // pred_fallthru
      _
    %p505 = scmp.le.s32.totalorder 1, %s23
    %p506 = scmp.lt.s32.totalorder %s23, 3
    %p507 = pnand %p505, %p506
    %p508 = pneg %p507
    // Predicated region
    $region85: #{_lambda_.1} parent=5 // pred_check
      _
    $region86: #{_lambda_.1} parent=5 // pred_check_branch
      %510 = sbr.rel (%p507) target = $region88
    $region87: #{_lambda_.1} parent=5 // pred_region
      %s511 = ssub.s32 %s23, 1
      %p512 = scmp.lt.s32.totalorder %s32, 1
      %s513 = scalar_select %p512, %s32, 1
      %p514 = scmp.lt.s32.totalorder %s33, 0
      %s515 = scalar_select %p514, %s33, 0
      %s516 = smul.addr %s513, 5
      %s517 = sadd.s32 %s515, %s516
      %s518 = smul.addr %s517, 4
      %s519 = scalar_lea.vmem %s0, %s518
      %p520 = pneg %p63
      %p521 = pneg %p60
      %p522 = pneg %p84
      %p523 = pneg %p81
      %p524 = pneg %p105
      %p525 = pneg %p102
      %p526 = pneg %p126
      %p527 = pneg %p123
      %p528 = pneg %p147
      %p529 = pneg %p144
      %p530 = pneg %p168
      %p531 = pneg %p165
      %p532 = pneg %p189
      %p533 = pneg %p186
      %p534 = pneg %p210
      %p535 = pneg %p207
      %p536 = pneg %p231
      %p537 = pneg %p228
      %p538 = pneg %p252
      %p539 = pneg %p249
      %p540 = pneg %p273
      %p541 = pneg %p270
      %p542 = pneg %p294
      %p543 = pneg %p291
      %p544 = pneg %p315
      %p545 = pneg %p312
      %p546 = pneg %p336
      %p547 = pneg %p333
      %p548 = pneg %p357
      %p549 = pneg %p354
      %p550 = pneg %p378
      %p551 = pneg %p375
      %p552 = pneg %p399
      %p553 = pneg %p396
      %p554 = pneg %p427
      %p555 = pneg %p424
      %p556 = scmp.lt.s32.totalorder %s32, 1
      %s557 = scalar_select %p556, %s32, 1
      %p558 = scmp.lt.s32.totalorder %s33, 0
      %s559 = scalar_select %p558, %s33, 0
      %s560 = sadd.s32 %s559, %s557
      %s561 = smul.addr %s560, 8
      %s562 = scalar_lea.vmem %s17, %s561
      %p563 = scmp.lt.s32.totalorder %s32, 1
      %s564 = scalar_select %p563, %s32, 1
      %p565 = scmp.lt.s32.totalorder %s33, 0
      %s566 = scalar_select %p565, %s33, 0
      %s567 = smul.addr %s564, 5
      %s568 = sadd.s32 %s566, %s567
      %s569 = smul.addr %s568, 4
      %s570 = scalar_lea.vmem %s0, %s569
      %p571 = scmp.lt.s32.totalorder %s32, 1
      %s572 = scalar_select %p571, %s32, 1
      %p573 = scmp.lt.s32.totalorder %s33, 0
      %s574 = scalar_select %p573, %s33, 0
      %s575 = sadd.s32 %s574, %s572
      %s576 = smul.addr %s575, 8
      %s577 = scalar_lea.vmem %s17, %s576
      %v579 = vld [vmem:[%s570] sm:$0xf]
      %v580 = vld [vmem:[%s570 + $0x4] sm:$0xf]
      %v581 = vld [vmem:[%s570 + $0x8] sm:$0xf]
      %v582 = vld [vmem:[%s570 + $0xc] sm:$0xf]
      %v583 = vld [vmem:[%s570 + $0x10] sm:$0x3]
      %v584 = vld [vmem:[%s1] sm:$0xf]
      %v585 = vld [vmem:[%s1 + $0x4] sm:$0xf]
      %v586 = vld [vmem:[%s2] sm:$0xff]
      %v587 = vld [vmem:[%s2 + $0x8] sm:$0xff]
      %589 = vset.pattern.permute.xlu0 0
      %590 = vperm.xlu0 %589, %v586
      %v591 = vpop.permute.xlu0 %590
      %594 = vset.pattern.permute.xlu0 0
      %595 = vperm.xlu0 %594, %v587
      %v596 = vpop.permute.xlu0 %595
      %v600 = vunpack.c.l.b16 %v584
      %v601 = vunpack.c.l.b16 %v585
      %v602 = vpack.c.b16 %v601, %v600
      %v608 = vunpack.c.l.b16 %v579
      %v609 = vunpack.c.l.b16 %v580
      %v610 = vunpack.c.l.b16 %v581
      %v611 = vunpack.c.l.b16 %v582
      %v612 = vunpack.c.l.b16 %v583
      %v613 = vpack.c.b16 %v609, %v608
      %v614 = vpack.c.b16 %v611, %v610
      %v615 = vpack.c.b16 %v612, %v612
      %vm618 = vcmask 293888
      %v620 = vsel %vm618, %v602, 0
      %vm622 = vcmask 1041408
      %v624 = vsel %vm622, %v615, 0
      %626 = vmatpush.bf16.msra.mxu0 0
      %627 = vmatpush.bf16.msra.mxu0 0
      %628 = vmatpush.bf16.msra.mxu0 0
      %629 = vmatpush.bf16.msra.mxu0 0
      %630 = vmatpush.bf16.msra.mxu0 0
      %631 = vmatpush.bf16.msra.mxu0 %v624
      %632 = vmatpush.bf16.msra.mxu0 %v614
      %633 = vmatpush.bf16.msra.mxu0 %v613
      %634 = vmatmul.bf16.gmra.mxu0 %v620
      %v635 = vpop.f32.mrf.mxu0
      %v636 = vadd.f32 %v591, %v635
      %v637 = vpop.f32.mrf.mxu0
      %v638 = vadd.f32 %v596, %v637
      %639 = vdwg.mxu0
      %v640 = vsub.f32 0.0, %v636
      %v641 = vsub.f32 0.0, %v638
      %v642 = vmul.f32 %v640, 1.442695
      %v643 = vpow.pop %v642
      %v644 = vmul.f32 %v641, 1.442695
      %v645 = vpow.pop %v644
      %v646 = vadd.f32 %v643, 1.0
      %v647 = vadd.f32 %v645, 1.0
      %v648 = vrcp.pop %v646
      %v649 = vrcp.pop %v647
      %v650 = vmul.f32 %v636, %v648
      %v651 = vmul.f32 %v638, %v649
      %v652 = vpack.c.bf16 %v651, %v650
      %v653 = vld [vmem:[%s3] sm:$0xf]
      %v654 = vld [vmem:[%s3 + $0x4] sm:$0xf]
      %v655 = vld [vmem:[%s4] sm:$0xff]
      %v656 = vld [vmem:[%s4 + $0x8] sm:$0xff]
      %658 = vset.pattern.permute.xlu0 0
      %659 = vperm.xlu0 %658, %v655
      %v660 = vpop.permute.xlu0 %659
      %663 = vset.pattern.permute.xlu0 0
      %664 = vperm.xlu0 %663, %v656
      %v665 = vpop.permute.xlu0 %664
      %v669 = vunpack.c.l.b16 %v653
      %v670 = vunpack.c.l.b16 %v654
      %v671 = vpack.c.b16 %v670, %v669
      %vm672 = vcmask 130048
      %v674 = vsel %vm672, %v671, 0
      %676 = vmatpush.bf16.msra.mxu0 0
      %677 = vmatpush.bf16.msra.mxu0 0
      %678 = vmatpush.bf16.msra.mxu0 0
      %679 = vmatpush.bf16.msra.mxu0 0
      %680 = vmatpush.bf16.msra.mxu0 0
      %681 = vmatpush.bf16.msra.mxu0 0
      %682 = vmatpush.bf16.msra.mxu0 0
      %683 = vmatpush.bf16.msra.mxu0 %v652
      %684 = vmatmul.bf16.gmra.mxu0 %v674
      %v685 = vpop.f32.mrf.mxu0
      %v686 = vadd.f32 %v660, %v685
      %v687 = vpop.f32.mrf.mxu0
      %v688 = vadd.f32 %v665, %v687
      %689 = vdwg.mxu0
      %v690 = vpack.c.bf16 %v688, %v686
      %v691 = vld [vmem:[%s5] sm:$0xf]
      %v692 = vld [vmem:[%s5 + $0x4] sm:$0xf]
      %v693 = vld [vmem:[%s6] sm:$0xff]
      %v694 = vld [vmem:[%s6 + $0x8] sm:$0xff]
      %696 = vset.pattern.permute.xlu0 0
      %697 = vperm.xlu0 %696, %v693
      %v698 = vpop.permute.xlu0 %697
      %701 = vset.pattern.permute.xlu0 0
      %702 = vperm.xlu0 %701, %v694
      %v703 = vpop.permute.xlu0 %702
      %v707 = vunpack.c.l.b16 %v691
      %v708 = vunpack.c.l.b16 %v692
      %v709 = vpack.c.b16 %v708, %v707
      %v711 = vsel %vm672, %v709, 0
      %713 = vmatpush.bf16.msra.mxu0 0
      %714 = vmatpush.bf16.msra.mxu0 0
      %715 = vmatpush.bf16.msra.mxu0 0
      %716 = vmatpush.bf16.msra.mxu0 0
      %717 = vmatpush.bf16.msra.mxu0 0
      %718 = vmatpush.bf16.msra.mxu0 0
      %719 = vmatpush.bf16.msra.mxu0 0
      %720 = vmatpush.bf16.msra.mxu0 %v690
      %721 = vmatmul.bf16.gmra.mxu0 %v711
      %v722 = vpop.f32.mrf.mxu0
      %v723 = vadd.f32 %v698, %v722
      %v724 = vpop.f32.mrf.mxu0
      %v725 = vadd.f32 %v703, %v724
      %726 = vdwg.mxu0
      %v727 = vmax.f32 %v723, 0.0
      %v728 = vmax.f32 %v725, 0.0
      %v729 = vpack.c.bf16 %v728, %v727
      %v730 = vld [vmem:[%s7] sm:$0xf]
      %v731 = vld [vmem:[%s7 + $0x4] sm:$0xf]
      %v732 = vld [vmem:[%s8] sm:$0xff]
      %v733 = vld [vmem:[%s8 + $0x8] sm:$0xff]
      %735 = vset.pattern.permute.xlu0 0
      %736 = vperm.xlu0 %735, %v732
      %v737 = vpop.permute.xlu0 %736
      %740 = vset.pattern.permute.xlu0 0
      %741 = vperm.xlu0 %740, %v733
      %v742 = vpop.permute.xlu0 %741
      %v746 = vunpack.c.l.b16 %v730
      %v747 = vunpack.c.l.b16 %v731
      %v748 = vpack.c.b16 %v747, %v746
      %v750 = vsel %vm672, %v748, 0
      %752 = vmatpush.bf16.msra.mxu0 0
      %753 = vmatpush.bf16.msra.mxu0 0
      %754 = vmatpush.bf16.msra.mxu0 0
      %755 = vmatpush.bf16.msra.mxu0 0
      %756 = vmatpush.bf16.msra.mxu0 0
      %757 = vmatpush.bf16.msra.mxu0 0
      %758 = vmatpush.bf16.msra.mxu0 0
      %759 = vmatpush.bf16.msra.mxu0 %v729
      %760 = vmatmul.bf16.gmra.mxu0 %v750
      %v761 = vpop.f32.mrf.mxu0
      %v762 = vadd.f32 %v737, %v761
      %v763 = vpop.f32.mrf.mxu0
      %v764 = vadd.f32 %v742, %v763
      %765 = vdwg.mxu0
      %v766 = vmax.f32 %v762, 0.0
      %v767 = vmax.f32 %v764, 0.0
      %v768 = vpack.c.bf16 %v767, %v766
      %v769 = vld [vmem:[%s9] sm:$0xf]
      %v770 = vld [vmem:[%s9 + $0x4] sm:$0xf]
      %v771 = vld [vmem:[%s9 + $0x8] sm:$0xf]
      %v772 = vld [vmem:[%s9 + $0xc] sm:$0xf]
      %v773 = vld [vmem:[%s10] sm:$0xff]
      %v774 = vld [vmem:[%s10 + $0x8] sm:$0xff]
      %v775 = vld [vmem:[%s10 + $0x10] sm:$0xff]
      %v776 = vld [vmem:[%s10 + $0x18] sm:$0xff]
      %778 = vset.pattern.permute.xlu0 0
      %779 = vperm.xlu0 %778, %v773
      %v780 = vpop.permute.xlu0 %779
      %783 = vset.pattern.permute.xlu0 0
      %784 = vperm.xlu0 %783, %v774
      %v785 = vpop.permute.xlu0 %784
      %788 = vset.pattern.permute.xlu0 0
      %789 = vperm.xlu0 %788, %v775
      %v790 = vpop.permute.xlu0 %789
      %793 = vset.pattern.permute.xlu0 0
      %794 = vperm.xlu0 %793, %v776
      %v795 = vpop.permute.xlu0 %794
      %v801 = vunpack.c.l.b16 %v769
      %v802 = vunpack.c.l.b16 %v770
      %v803 = vunpack.c.l.b16 %v771
      %v804 = vunpack.c.l.b16 %v772
      %v805 = vpack.c.b16 %v802, %v801
      %v806 = vpack.c.b16 %v804, %v803
      %v808 = vsel %vm672, %v805, 0
      %v811 = vsel %vm672, %v806, 0
      %813 = vmatpush.bf16.msra.mxu0 0
      %814 = vmatpush.bf16.msra.mxu0 0
      %815 = vmatpush.bf16.msra.mxu0 0
      %816 = vmatpush.bf16.msra.mxu0 0
      %817 = vmatpush.bf16.msra.mxu0 0
      %818 = vmatpush.bf16.msra.mxu0 0
      %819 = vmatpush.bf16.msra.mxu0 0
      %820 = vmatpush.bf16.msra.mxu0 %v768
      %821 = vmatmul.bf16.gmra.mxu0 %v808
      %v822 = vpop.f32.mrf.mxu0
      %v823 = vadd.f32 %v780, %v822
      %v824 = vpop.f32.mrf.mxu0
      %v825 = vadd.f32 %v785, %v824
      %826 = vmatmul.bf16.gmra.mxu0 %v811
      %v827 = vpop.f32.mrf.mxu0
      %v828 = vadd.f32 %v790, %v827
      %v829 = vpop.f32.mrf.mxu0
      %v830 = vadd.f32 %v795, %v829
      %831 = vdwg.mxu0
      %v832 = vpack.c.bf16 %v825, %v823
      %v833 = vpack.c.bf16 %v830, %v828
      %v834 = vld [vmem:[%s11] sm:$0xf]
      %v835 = vld [vmem:[%s11 + $0x4] sm:$0xf]
      %v836 = vld [vmem:[%s11 + $0x8] sm:$0xf]
      %v837 = vld [vmem:[%s11 + $0xc] sm:$0xf]
      %v838 = vld [vmem:[%s12] sm:$0xff]
      %v839 = vld [vmem:[%s12 + $0x8] sm:$0xff]
      %v840 = vld [vmem:[%s12 + $0x10] sm:$0xff]
      %v841 = vld [vmem:[%s12 + $0x18] sm:$0xff]
      %843 = vset.pattern.permute.xlu0 0
      %844 = vperm.xlu0 %843, %v838
      %v845 = vpop.permute.xlu0 %844
      %848 = vset.pattern.permute.xlu0 0
      %849 = vperm.xlu0 %848, %v839
      %v850 = vpop.permute.xlu0 %849
      %853 = vset.pattern.permute.xlu0 0
      %854 = vperm.xlu0 %853, %v840
      %v855 = vpop.permute.xlu0 %854
      %858 = vset.pattern.permute.xlu0 0
      %859 = vperm.xlu0 %858, %v841
      %v860 = vpop.permute.xlu0 %859
      %v866 = vunpack.c.l.b16 %v834
      %v867 = vunpack.c.l.b16 %v835
      %v868 = vunpack.c.l.b16 %v836
      %v869 = vunpack.c.l.b16 %v837
      %v870 = vpack.c.b16 %v867, %v866
      %v871 = vpack.c.b16 %v869, %v868
      %vm872 = vcmask 261120
      %v874 = vsel %vm872, %v870, 0
      %v877 = vsel %vm872, %v871, 0
      %879 = vmatpush.bf16.msra.mxu0 0
      %880 = vmatpush.bf16.msra.mxu0 0
      %881 = vmatpush.bf16.msra.mxu0 0
      %882 = vmatpush.bf16.msra.mxu0 0
      %883 = vmatpush.bf16.msra.mxu0 0
      %884 = vmatpush.bf16.msra.mxu0 0
      %885 = vmatpush.bf16.msra.mxu0 %v833
      %886 = vmatpush.bf16.msra.mxu0 %v832
      %887 = vmatmul.bf16.gmra.mxu0 %v874
      %v888 = vpop.f32.mrf.mxu0
      %v889 = vadd.f32 %v845, %v888
      %v890 = vpop.f32.mrf.mxu0
      %v891 = vadd.f32 %v850, %v890
      %892 = vmatmul.bf16.gmra.mxu0 %v877
      %v893 = vpop.f32.mrf.mxu0
      %v894 = vadd.f32 %v855, %v893
      %v895 = vpop.f32.mrf.mxu0
      %v896 = vadd.f32 %v860, %v895
      %897 = vdwg.mxu0
      %v898 = vmax.f32 %v889, 0.0
      %v899 = vmax.f32 %v891, 0.0
      %v900 = vmax.f32 %v894, 0.0
      %v901 = vmax.f32 %v896, 0.0
      %v902 = vpack.c.bf16 %v899, %v898
      %v903 = vpack.c.bf16 %v901, %v900
      %v904 = vld [vmem:[%s13] sm:$0xf]
      %v905 = vld [vmem:[%s13 + $0x4] sm:$0xf]
      %v906 = vld [vmem:[%s13 + $0x8] sm:$0xf]
      %v907 = vld [vmem:[%s13 + $0xc] sm:$0xf]
      %v908 = vld [vmem:[%s14] sm:$0xff]
      %v909 = vld [vmem:[%s14 + $0x8] sm:$0xff]
      %v910 = vld [vmem:[%s14 + $0x10] sm:$0xff]
      %v911 = vld [vmem:[%s14 + $0x18] sm:$0xff]
      %913 = vset.pattern.permute.xlu0 0
      %914 = vperm.xlu0 %913, %v908
      %v915 = vpop.permute.xlu0 %914
      %918 = vset.pattern.permute.xlu0 0
      %919 = vperm.xlu0 %918, %v909
      %v920 = vpop.permute.xlu0 %919
      %923 = vset.pattern.permute.xlu0 0
      %924 = vperm.xlu0 %923, %v910
      %v925 = vpop.permute.xlu0 %924
      %928 = vset.pattern.permute.xlu0 0
      %929 = vperm.xlu0 %928, %v911
      %v930 = vpop.permute.xlu0 %929
      %v936 = vunpack.c.l.b16 %v904
      %v937 = vunpack.c.l.b16 %v905
      %v938 = vunpack.c.l.b16 %v906
      %v939 = vunpack.c.l.b16 %v907
      %v940 = vpack.c.b16 %v937, %v936
      %v941 = vpack.c.b16 %v939, %v938
      %v943 = vsel %vm872, %v940, 0
      %v946 = vsel %vm872, %v941, 0
      %948 = vmatpush.bf16.msra.mxu0 0
      %949 = vmatpush.bf16.msra.mxu0 0
      %950 = vmatpush.bf16.msra.mxu0 0
      %951 = vmatpush.bf16.msra.mxu0 0
      %952 = vmatpush.bf16.msra.mxu0 0
      %953 = vmatpush.bf16.msra.mxu0 0
      %954 = vmatpush.bf16.msra.mxu0 %v903
      %955 = vmatpush.bf16.msra.mxu0 %v902
      %956 = vmatmul.bf16.gmra.mxu0 %v943
      %v957 = vpop.f32.mrf.mxu0
      %v958 = vadd.f32 %v915, %v957
      %v959 = vpop.f32.mrf.mxu0
      %v960 = vadd.f32 %v920, %v959
      %961 = vmatmul.bf16.gmra.mxu0 %v946
      %v962 = vpop.f32.mrf.mxu0
      %v963 = vadd.f32 %v925, %v962
      %v964 = vpop.f32.mrf.mxu0
      %v965 = vadd.f32 %v930, %v964
      %966 = vdwg.mxu0
      %v967 = vmax.f32 %v958, 0.0
      %v968 = vmax.f32 %v960, 0.0
      %v969 = vmax.f32 %v963, 0.0
      %v970 = vmax.f32 %v965, 0.0
      %v971 = vpack.c.bf16 %v968, %v967
      %v972 = vpack.c.bf16 %v970, %v969
      %v973 = vld [vmem:[%s15] sm:$0xf]
      %v974 = vld [vmem:[%s16] sm:$0xff]
      %976 = vset.pattern.permute.xlu0 0
      %977 = vperm.xlu0 %976, %v974
      %v978 = vpop.permute.xlu0 %977
      %v981 = vsel %vm872, %v973, 0
      %983 = vmatpush.bf16.msra.mxu0 0
      %984 = vmatpush.bf16.msra.mxu0 0
      %985 = vmatpush.bf16.msra.mxu0 0
      %986 = vmatpush.bf16.msra.mxu0 0
      %987 = vmatpush.bf16.msra.mxu0 0
      %988 = vmatpush.bf16.msra.mxu0 0
      %989 = vmatpush.bf16.msra.mxu0 %v972
      %990 = vmatpush.bf16.msra.mxu0 %v971
      %991 = vmatmul.bf16.gmra.mxu0 %v981
      %v992 = vpop.f32.mrf.mxu0
      %v993 = vadd.f32 %v978, %v992
      %v994 = vpop.f32.mrf.mxu0
      %995 = vdwg.mxu0
      %996 = vst [vmem:[%s577] sm:$0xff] %v993
      %p997 = scmp.lt.s32.totalorder %s32, 1
      %s998 = scalar_select %p997, %s32, 1
      %p999 = scmp.lt.s32.totalorder %s33, 0
      %s1000 = scalar_select %p999, %s33, 0
      %s1001 = sadd.s32 %s1000, %s998
      %s1002 = smul.addr %s1001, 8
      %s1003 = scalar_lea.vmem %s17, %s1002
      // Predicated region
      $region89: #{_lambda_.1} parent=87 // pred_check
        %p1004 = pneg %p424
      $region90: #{_lambda_.1} parent=87 // pred_check_branch
        %1006 = sbr.rel (%p1004) target = $region92
      $region91: #{_lambda_.1} parent=87 // pred_region
        _
      $region92: #{_lambda_.1} parent=87 // pred_fallthru
        _
    $region88: #{_lambda_.1} parent=5 // pred_fallthru
      _
    %p1007 = scmp.le.s32.totalorder 2, %s23
    // Predicated region
    $region93: #{_lambda_.1} parent=5 // pred_check
      %p1008 = pneg %p1007
    $region94: #{_lambda_.1} parent=5 // pred_check_branch
      %1010 = sbr.rel (%p1008) target = $region96
    $region95: #{_lambda_.1} parent=5 // pred_region
      %s1011 = ssub.s32 %s23, 2
      // Predicated region
      $region97: #{_lambda_.1} parent=95 // pred_check
        %p1012 = pneg %p430
      $region98: #{_lambda_.1} parent=95 // pred_check_branch
        %1014 = sbr.rel (%p1012) target = $region100
      $region99: #{_lambda_.1} parent=95 // pred_region
        %p1015 = scmp.lt.s32.totalorder %s34, 1
        %s1016 = scalar_select %p1015, %s34, 1
        %p1017 = scmp.lt.s32.totalorder %s35, 0
        %s1018 = scalar_select %p1017, %s35, 0
        %s1019 = sadd.s32 %s1018, %s1016
        %s1020 = smul.addr %s1019, 8
        %s1021 = scalar_lea.vmem %s17, %s1020
      $region100: #{_lambda_.1} parent=95 // pred_fallthru
        _
    $region96: #{_lambda_.1} parent=5 // pred_fallthru
      _
  $region6: #{_lambda_.1} parent=0 // loop_footer
    %s27 = sadd.s32 1, %s23
  $region7: #{_lambda_.1} parent=0 // loop_footer_branch
    %22 = sbr.rel target = $region3
  $region8: #{_lambda_.1} parent=0 // loop_exit
    _

</llo_original>
